<compile_context>
chip_gen: v7x
topology: tpu7x:2x2x1
jax: 0.10.0
libtpu: 0.0.40
codegen_flags: <defaults>
</compile_context>

<pallas_src>
from functools import partial

import jax
import jax.numpy as jnp
from jax.experimental import pallas as pl
from jax.experimental.pallas import tpu as pltpu


# ----------------------------------------------------------------------------
# Fused kernel: synthetic inner model (3 deduplicated CFG branches) + CFG combine
# ----------------------------------------------------------------------------
def _cfg_denoiser_kernel(text_cfg_scale, image_cfg_scale,
                         sigma_ref, z_ref, cc_c_ref, cc_u_ref,
                         ctx_c_ref, ctx_u_ref, wz_ref, wc_ref, w2t_ref, out_ref):
    # text/image cfg scales : Python floats baked at compile time
    # sigma_ref : SMEM [1]
    # z_ref     : VMEM [C, HW]   latent, lane-dense (HW on lanes)
    # cc_c_ref  : VMEM [C, HW]   cond   c_concat
    # cc_u_ref  : VMEM [C, HW]   uncond c_concat
    # ctx_c_ref : VMEM [T, D]    cond   c_crossattn embeddings
    # ctx_u_ref : VMEM [T, D]    uncond c_crossattn embeddings
    # wz_ref    : VMEM [C, C]    channel-mix weight for z, pre-transposed (w1a^T)
    # wc_ref    : VMEM [C, C]    channel-mix weight for c_concat, pre-transposed (w1b^T)
    # w2t_ref   : VMEM [C, D]    context projection, pre-transposed (w2^T)
    # out_ref   : VMEM [C, HW]   CFG-combined denoised latent (aliases z's HBM buffer)
    #
    # TODO(synk): the real inner_model is an external UNet; this is a synthetic
    # conditioned denoiser with the same input/output contract.
    sigma = sigma_ref[0]

    # sigma-dependent scalings computed once (shared by all three branches)
    c_in = jax.lax.rsqrt(sigma * sigma + 1.0)
    c_skip = 1.0 / (sigma * sigma + 1.0)
    c_out = sigma * c_in

    z = z_ref[...]                                               # [C, HW]

    # 1x1-conv channel mix as dense whole-tile matmuls (MXU), once per distinct
    # operand instead of once per CFG branch.
    hz = jnp.dot(wz_ref[...], z, preferred_element_type=jnp.float32) * c_in
    hc = jnp.dot(wc_ref[...], cc_c_ref[...], preferred_element_type=jnp.float32)
    hu = jnp.dot(wc_ref[...], cc_u_ref[...], preferred_element_type=jnp.float32)
    hzc = hz + hc                                                # hidden(z, cond   concat)
    hzu = hz + hu                                                # hidden(z, uncond concat)

    # pooled cross-attention bias per channel; linear => pool-then-project.
    # bias[j] = sum_d w2[d, j] * mean_t ctx[t, d]
    mean_c = jnp.mean(ctx_c_ref[...], axis=0, keepdims=True)     # [1, D]
    mean_u = jnp.mean(ctx_u_ref[...], axis=0, keepdims=True)     # [1, D]
    w2t = w2t_ref[...]                                           # [C, D]
    bias_c = jnp.sum(w2t * mean_c, axis=1, keepdims=True)        # [C, 1]
    bias_u = jnp.sum(w2t * mean_u, axis=1, keepdims=True)        # [C, 1]

    # The three distinct CFG branches (dense [C, HW] tanh each; EUP).
    t_cond = jnp.tanh(hzc + bias_c)   # branch 0: cond ctx,   cond concat
    t_img = jnp.tanh(hzc + bias_u)    # branch 1: uncond ctx, cond concat
    t_unc = jnp.tanh(hzu + bias_u)    # branch 2: uncond ctx, uncond concat

    guided = (t_unc
              + text_cfg_scale * (t_cond - t_img)
              + image_cfg_scale * (t_img - t_unc))

    # single lane/sublane-dense store
    out_ref[...] = (c_skip * z + c_out * guided).astype(out_ref.dtype)


# ----------------------------------------------------------------------------
# One-time parameter prep (done at init, not per call)
# ----------------------------------------------------------------------------
def prepare_params(raw_params):
    return {
        "w1a_t": jnp.asarray(raw_params["w1a"], jnp.float32).T,   # [C, C]
        "w1b_t": jnp.asarray(raw_params["w1b"], jnp.float32).T,   # [C, C]
        "w2_t": jnp.asarray(raw_params["w2"], jnp.float32).T,     # [C, D]
    }


# ----------------------------------------------------------------------------
# CFGDenoiser.forward equivalent
# ----------------------------------------------------------------------------
@partial(jax.jit, static_argnums=(4, 5))
def cfg_denoiser_forward(z, sigma, cond, uncond, text_cfg_scale, image_cfg_scale, params):
    # z: [1, C, H, W] (NCHW, like PyTorch), sigma: [1]
    one, C, H, W = z.shape
    assert one == 1
    HW = H * W
    T, D = cond["c_crossattn"][0].shape[1:]

    # NCHW already has HW contiguous in the trailing dims -> [C, HW] is a pure reshape.
    z_f = z.reshape(C, HW).astype(jnp.float32)
    cc_c = cond["c_concat"][0].reshape(C, HW).astype(jnp.float32)
    cc_u = uncond["c_concat"][0].reshape(C, HW).astype(jnp.float32)
    ctx_c = cond["c_crossattn"][0][0].astype(jnp.float32)
    ctx_u = uncond["c_crossattn"][0][0].astype(jnp.float32)
    sig = jnp.reshape(sigma, (1,)).astype(jnp.float32)
    # TODO(synk): cond['c_crossattn'][1] is forwarded untouched to the real inner
    # model in the reference; the synthetic inner model does not consume it.

    kernel = partial(_cfg_denoiser_kernel, float(text_cfg_scale), float(image_cfg_scale))

    out = pl.pallas_call(
        kernel,
        out_shape=jax.ShapeDtypeStruct((C, HW), jnp.float32),
        in_specs=[
            pl.BlockSpec(memory_space=pltpu.MemorySpace.SMEM),   # sigma [1]
            pl.BlockSpec((C, HW), lambda: (0, 0)),               # z
            pl.BlockSpec((C, HW), lambda: (0, 0)),               # c_concat cond
            pl.BlockSpec((C, HW), lambda: (0, 0)),               # c_concat uncond
            pl.BlockSpec((T, D), lambda: (0, 0)),                # c_crossattn cond
            pl.BlockSpec((T, D), lambda: (0, 0)),                # c_crossattn uncond
            pl.BlockSpec((C, C), lambda: (0, 0)),                # w1a^T
            pl.BlockSpec((C, C), lambda: (0, 0)),                # w1b^T
            pl.BlockSpec((C, D), lambda: (0, 0)),                # w2^T
        ],
        out_specs=pl.BlockSpec((C, HW), lambda: (0, 0)),
        input_output_aliases={1: 0},   # reuse z_f's buffer for the output
    )(sig, z_f, cc_c, cc_u, ctx_c, ctx_u,
      params["w1a_t"], params["w1b_t"], params["w2_t"])

    return out.reshape(1, C, H, W)


# ----------------------------------------------------------------------------
# Pure-JAX reference (same synthetic inner model, explicit 3-branch CFG batch)
# ----------------------------------------------------------------------------
def _reference(z, sigma, cond, uncond, text_cfg_scale, image_cfg_scale, raw_params):
    _, C, H, W = z.shape
    cfg_z = jnp.broadcast_to(z, (3, C, H, W))
    cfg_sigma = jnp.broadcast_to(sigma, (3,)).astype(jnp.float32)
    cfg_crossattn = jnp.concatenate(
        [cond["c_crossattn"][0], uncond["c_crossattn"][0], uncond["c_crossattn"][0]], axis=0)
    cfg_concat = jnp.concatenate(
        [cond["c_concat"][0], cond["c_concat"][0], uncond["c_concat"][0]], axis=0)

    hi = jax.lax.Precision.HIGHEST

    def inner(zz, s, ctx, cc):
        zf = zz.transpose(1, 2, 0).reshape(H * W, C)
        cf = cc.transpose(1, 2, 0).reshape(H * W, C)
        c_in = 1.0 / jnp.sqrt(s * s + 1.0)
        c_skip = 1.0 / (s * s + 1.0)
        c_out = s * c_in
        hidden = (jnp.dot(zf * c_in, raw_params["w1a"], precision=hi)
                  + jnp.dot(cf, raw_params["w1b"], precision=hi))
        bias = jnp.mean(jnp.dot(ctx, raw_params["w2"], precision=hi), axis=0, keepdims=True)
        out = c_skip * zf + c_out * jnp.tanh(hidden + bias)
        return out.reshape(H, W, C).transpose(2, 0, 1)

    outs = jnp.stack([inner(cfg_z[i], cfg_sigma[i], cfg_crossattn[i], cfg_concat[i])
                      for i in range(3)])
    out_cond, out_img_cond, out_uncond = outs[0], outs[1], outs[2]
    res = (out_uncond
           + text_cfg_scale * (out_cond - out_img_cond)
           + image_cfg_scale * (out_img_cond - out_uncond))
    return res[None]


if __name__ == "__main__":
    C, H, W, T, D = 4, 16, 16, 8, 32
    key = jax.random.PRNGKey(0)
    keys = jax.random.split(key, 8)

    z = jax.random.normal(keys[0], (1, C, H, W), jnp.float32)
    sigma = jnp.array([1.2], jnp.float32)
    cond = {
        "c_crossattn": [jax.random.normal(keys[1], (1, T, D), jnp.float32),
                        jax.random.normal(keys[2], (1, T), jnp.float32)],  # opaque extra entry
        "c_concat": [jax.random.normal(keys[3], (1, C, H, W), jnp.float32)],
    }
    uncond = {
        "c_crossattn": [jnp.zeros((1, T, D), jnp.float32)],
        "c_concat": [jnp.zeros((1, C, H, W), jnp.float32)],
    }
    raw_params = {
        "w1a": 0.1 * jax.random.normal(keys[4], (C, C), jnp.float32),
        "w1b": 0.1 * jax.random.normal(keys[5], (C, C), jnp.float32),
        "w2": 0.1 * jax.random.normal(keys[6], (D, C), jnp.float32),
    }
    params = prepare_params(raw_params)   # one-time weight transposes (init, not per call)
    text_cfg_scale, image_cfg_scale = 7.5, 1.5

    out = cfg_denoiser_forward(z, sigma, cond, uncond,
                               text_cfg_scale, image_cfg_scale, params)
    out = jax.block_until_ready(out)
    assert out.shape == z.shape and out.dtype == jnp.float32

    ref = _reference(z, sigma, cond, uncond, text_cfg_scale, image_cfg_scale, raw_params)
    err = float(jnp.max(jnp.abs(out - ref)))
    assert jnp.allclose(out, ref, atol=2e-3, rtol=2e-3), err

    print("KERNEL_OK")
</pallas_src>

<mosaic_0001>
module attributes {stable_mosaic.version = 11 : i64} {
  func.func @_cfg_denoiser_kernel(%arg0: memref<1xf32, #tpu.memory_space<smem>>, %arg1: memref<4x256xf32, #tpu.memory_space<vmem>>, %arg2: memref<4x256xf32, #tpu.memory_space<vmem>>, %arg3: memref<4x256xf32, #tpu.memory_space<vmem>>, %arg4: memref<8x32xf32, #tpu.memory_space<vmem>>, %arg5: memref<8x32xf32, #tpu.memory_space<vmem>>, %arg6: memref<4x4xf32, #tpu.memory_space<vmem>>, %arg7: memref<4x4xf32, #tpu.memory_space<vmem>>, %arg8: memref<4x32xf32, #tpu.memory_space<vmem>>, %arg9: memref<4x256xf32, #tpu.memory_space<vmem>>) attributes {dimension_semantics = [], scalar_prefetch = 0 : i64, scratch_operands = 0 : i64, tpu.core_type = #tpu.core_type<tc>} {
    %c0 = arith.constant 0 : index
    %0 = memref.load %arg0[%c0] : memref<1xf32, #tpu.memory_space<smem>>
    %1 = arith.mulf %0, %0 : f32
    %cst = arith.constant 1.000000e+00 : f32
    %2 = arith.addf %1, %cst : f32
    %3 = math.rsqrt %2 : f32
    %4 = arith.mulf %0, %0 : f32
    %cst_0 = arith.constant 1.000000e+00 : f32
    %5 = arith.addf %4, %cst_0 : f32
    %cst_1 = arith.constant 1.000000e+00 : f32
    %6 = arith.divf %cst_1, %5 : f32
    %7 = arith.mulf %0, %3 : f32
    %c0_2 = arith.constant 0 : index
    %c0_3 = arith.constant 0 : index
    %8 = vector.load %arg1[%c0_2, %c0_3] : memref<4x256xf32, #tpu.memory_space<vmem>>, vector<4x256xf32>
    %c0_4 = arith.constant 0 : index
    %c0_5 = arith.constant 0 : index
    %9 = vector.load %arg6[%c0_4, %c0_5] : memref<4x4xf32, #tpu.memory_space<vmem>>, vector<4x4xf32>
    %cst_6 = arith.constant dense<0.000000e+00> : vector<4x256xf32>
    %10 = tpu.matmul %9, %8, %cst_6 {dimension_numbers = #tpu.dot_dimension_numbers<[1], [0], [0], [1], [0, 0, 1, 1], [], []>} : vector<4x4xf32>, vector<4x256xf32>, vector<4x256xf32> -> vector<4x256xf32>
    %11 = vector.broadcast %3 : f32 to vector<4x256xf32>
    %12 = arith.mulf %10, %11 : vector<4x256xf32>
    %c0_7 = arith.constant 0 : index
    %c0_8 = arith.constant 0 : index
    %13 = vector.load %arg7[%c0_7, %c0_8] : memref<4x4xf32, #tpu.memory_space<vmem>>, vector<4x4xf32>
    %c0_9 = arith.constant 0 : index
    %c0_10 = arith.constant 0 : index
    %14 = vector.load %arg2[%c0_9, %c0_10] : memref<4x256xf32, #tpu.memory_space<vmem>>, vector<4x256xf32>
    %cst_11 = arith.constant dense<0.000000e+00> : vector<4x256xf32>
    %15 = tpu.matmul %13, %14, %cst_11 {dimension_numbers = #tpu.dot_dimension_numbers<[1], [0], [0], [1], [0, 0, 1, 1], [], []>} : vector<4x4xf32>, vector<4x256xf32>, vector<4x256xf32> -> vector<4x256xf32>
    %c0_12 = arith.constant 0 : index
    %c0_13 = arith.constant 0 : index
    %16 = vector.load %arg7[%c0_12, %c0_13] : memref<4x4xf32, #tpu.memory_space<vmem>>, vector<4x4xf32>
    %c0_14 = arith.constant 0 : index
    %c0_15 = arith.constant 0 : index
    %17 = vector.load %arg3[%c0_14, %c0_15] : memref<4x256xf32, #tpu.memory_space<vmem>>, vector<4x256xf32>
    %cst_16 = arith.constant dense<0.000000e+00> : vector<4x256xf32>
    %18 = tpu.matmul %16, %17, %cst_16 {dimension_numbers = #tpu.dot_dimension_numbers<[1], [0], [0], [1], [0, 0, 1, 1], [], []>} : vector<4x4xf32>, vector<4x256xf32>, vector<4x256xf32> -> vector<4x256xf32>
    %19 = arith.addf %12, %15 : vector<4x256xf32>
    %20 = arith.addf %12, %18 : vector<4x256xf32>
    %c0_17 = arith.constant 0 : index
    %c0_18 = arith.constant 0 : index
    %21 = vector.load %arg4[%c0_17, %c0_18] : memref<8x32xf32, #tpu.memory_space<vmem>>, vector<8x32xf32>
    %cst_19 = arith.constant dense<0.000000e+00> : vector<32xf32>
    %22 = vector.multi_reduction <add>, %21, %cst_19 [0] : vector<8x32xf32> to vector<32xf32>
    %23 = vector.shape_cast %22 : vector<32xf32> to vector<1x32xf32>
    %cst_20 = arith.constant 8.000000e+00 : f32
    %24 = vector.broadcast %cst_20 : f32 to vector<1x32xf32>
    %25 = arith.divf %23, %24 : vector<1x32xf32>
    %c0_21 = arith.constant 0 : index
    %c0_22 = arith.constant 0 : index
    %26 = vector.load %arg5[%c0_21, %c0_22] : memref<8x32xf32, #tpu.memory_space<vmem>>, vector<8x32xf32>
    %cst_23 = arith.constant dense<0.000000e+00> : vector<32xf32>
    %27 = vector.multi_reduction <add>, %26, %cst_23 [0] : vector<8x32xf32> to vector<32xf32>
    %28 = vector.shape_cast %27 : vector<32xf32> to vector<1x32xf32>
    %cst_24 = arith.constant 8.000000e+00 : f32
    %29 = vector.broadcast %cst_24 : f32 to vector<1x32xf32>
    %30 = arith.divf %28, %29 : vector<1x32xf32>
    %c0_25 = arith.constant 0 : index
    %c0_26 = arith.constant 0 : index
    %31 = vector.load %arg8[%c0_25, %c0_26] : memref<4x32xf32, #tpu.memory_space<vmem>>, vector<4x32xf32>
    %32 = vector.broadcast %25 : vector<1x32xf32> to vector<4x32xf32>
    %33 = arith.mulf %31, %32 : vector<4x32xf32>
    %cst_27 = arith.constant dense<0.000000e+00> : vector<4xf32>
    %34 = vector.multi_reduction <add>, %33, %cst_27 [1] : vector<4x32xf32> to vector<4xf32>
    %35 = vector.shape_cast %34 : vector<4xf32> to vector<4x1xf32>
    %36 = vector.broadcast %30 : vector<1x32xf32> to vector<4x32xf32>
    %37 = arith.mulf %31, %36 : vector<4x32xf32>
    %cst_28 = arith.constant dense<0.000000e+00> : vector<4xf32>
    %38 = vector.multi_reduction <add>, %37, %cst_28 [1] : vector<4x32xf32> to vector<4xf32>
    %39 = vector.shape_cast %38 : vector<4xf32> to vector<4x1xf32>
    %40 = vector.broadcast %35 : vector<4x1xf32> to vector<4x256xf32>
    %41 = arith.addf %19, %40 : vector<4x256xf32>
    %42 = math.tanh %41 : vector<4x256xf32>
    %43 = vector.broadcast %39 : vector<4x1xf32> to vector<4x256xf32>
    %44 = arith.addf %19, %43 : vector<4x256xf32>
    %45 = math.tanh %44 : vector<4x256xf32>
    %46 = vector.broadcast %39 : vector<4x1xf32> to vector<4x256xf32>
    %47 = arith.addf %20, %46 : vector<4x256xf32>
    %48 = math.tanh %47 : vector<4x256xf32>
    %49 = arith.subf %42, %45 : vector<4x256xf32>
    %cst_29 = arith.constant 7.500000e+00 : f32
    %50 = vector.broadcast %cst_29 : f32 to vector<4x256xf32>
    %51 = arith.mulf %50, %49 : vector<4x256xf32>
    %52 = arith.addf %48, %51 : vector<4x256xf32>
    %53 = arith.subf %45, %48 : vector<4x256xf32>
    %cst_30 = arith.constant 1.500000e+00 : f32
    %54 = vector.broadcast %cst_30 : f32 to vector<4x256xf32>
    %55 = arith.mulf %54, %53 : vector<4x256xf32>
    %56 = arith.addf %52, %55 : vector<4x256xf32>
    %57 = vector.broadcast %6 : f32 to vector<4x256xf32>
    %58 = arith.mulf %57, %8 : vector<4x256xf32>
    %59 = vector.broadcast %7 : f32 to vector<4x256xf32>
    %60 = arith.mulf %59, %56 : vector<4x256xf32>
    %61 = arith.addf %58, %60 : vector<4x256xf32>
    %c0_31 = arith.constant 0 : index
    %c0_32 = arith.constant 0 : index
    %62 = vector.load %arg9[%c0_31, %c0_32] : memref<4x256xf32, #tpu.memory_space<vmem>>, vector<4x256xf32>
    tpu.vector_store %arg9[%c0_31, %c0_32], %61 {strides = array<i32>} : memref<4x256xf32, #tpu.memory_space<vmem>>, vector<4x256xf32>,
    return
  }
}

</mosaic_0001>

<llo_original>
// kernel: cfg_denoiser_forward.1
$region0: #{cfg_denoiser_forward.1}
  #allocation0 [shape = 'u32[]', space=smem, size = 0x4, offset = 0x4, fixed_abs, tag = 'smem constant byte address 0x4 - core index']
  #allocation1 [shape = 'u32[144,128]{1,0:T(1,128)}', space=vmem, size = 0x12000, scoped, tag = 'internal scratch']
  #allocation2 [shape = 'f32[1]{0:T(128)S(6)}', space=smem, size = 0x200, scoped, tag = 'scoped memory for cfg_denoiser_forward.1']
  %s0 = inlined_call_operand.<no memory space> [shape: f32[1], index: 0, kind: input, shape index: {}]
  %s1 = inlined_call_operand.vmem [shape: f32[4,256], index: 1, kind: input, shape index: {}, may-alias: {1,9}]
  %s2 = inlined_call_operand.vmem [shape: f32[4,256], index: 2, kind: input, shape index: {}]
  %s3 = inlined_call_operand.vmem [shape: f32[4,256], index: 3, kind: input, shape index: {}]
  %s4 = inlined_call_operand.vmem [shape: f32[8,32], index: 4, kind: input, shape index: {}]
  %s5 = inlined_call_operand.vmem [shape: f32[8,32], index: 5, kind: input, shape index: {}]
  %s6 = inlined_call_operand.vmem [shape: f32[4,4], index: 6, kind: input, shape index: {}]
  %s7 = inlined_call_operand.vmem [shape: f32[4,4], index: 7, kind: input, shape index: {}]
  %s8 = inlined_call_operand.vmem [shape: f32[4,32], index: 8, kind: input, shape index: {}]
  %s9 = inlined_call_operand.vmem [shape: f32[4,256], index: 9, kind: output, shape index: {}, may-alias: {1,9}]
  %s10 = sld [smem:[#allocation0]]
  $region46: #{cfg_denoiser_forward.1} parent=0
    _
  %s12 = ssub.s32 1, %s10
  %s13 = scalar_select 0, %s12, %s10
  %14 = sst [smem:[#allocation2]] %s0
  // Predicated region
  $region2: #{cfg_denoiser_forward.1} parent=0 // pred_check
    _
  $region3: #{cfg_denoiser_forward.1} parent=0 // pred_check_branch
    %16 = sbr.rel (0) target = $region5
  $region4: #{cfg_denoiser_forward.1} parent=0 // pred_region
    _
  $region5: #{cfg_denoiser_forward.1} parent=0 // pred_fallthru
    _
  // Predicated region
  $region6: #{cfg_denoiser_forward.1} parent=0 // pred_check
    _
  $region7: #{cfg_denoiser_forward.1} parent=0 // pred_check_branch
    %18 = sbr.rel (0) target = $region9
  $region8: #{cfg_denoiser_forward.1} parent=0 // pred_region
    _
  $region9: #{cfg_denoiser_forward.1} parent=0 // pred_fallthru
    _
  // Predicated region
  $region10: #{cfg_denoiser_forward.1} parent=0 // pred_check
    _
  $region11: #{cfg_denoiser_forward.1} parent=0 // pred_check_branch
    %20 = sbr.rel (0) target = $region13
  $region12: #{cfg_denoiser_forward.1} parent=0 // pred_region
    _
  $region13: #{cfg_denoiser_forward.1} parent=0 // pred_fallthru
    _
  // Predicated region
  $region14: #{cfg_denoiser_forward.1} parent=0 // pred_check
    _
  $region15: #{cfg_denoiser_forward.1} parent=0 // pred_check_branch
    %22 = sbr.rel (0) target = $region17
  $region16: #{cfg_denoiser_forward.1} parent=0 // pred_region
    _
  $region17: #{cfg_denoiser_forward.1} parent=0 // pred_fallthru
    _
  // Predicated region
  $region18: #{cfg_denoiser_forward.1} parent=0 // pred_check
    _
  $region19: #{cfg_denoiser_forward.1} parent=0 // pred_check_branch
    %24 = sbr.rel (0) target = $region21
  $region20: #{cfg_denoiser_forward.1} parent=0 // pred_region
    _
  $region21: #{cfg_denoiser_forward.1} parent=0 // pred_fallthru
    _
  // Predicated region
  $region22: #{cfg_denoiser_forward.1} parent=0 // pred_check
    _
  $region23: #{cfg_denoiser_forward.1} parent=0 // pred_check_branch
    %26 = sbr.rel (0) target = $region25
  $region24: #{cfg_denoiser_forward.1} parent=0 // pred_region
    _
  $region25: #{cfg_denoiser_forward.1} parent=0 // pred_fallthru
    _
  // Predicated region
  $region26: #{cfg_denoiser_forward.1} parent=0 // pred_check
    _
  $region27: #{cfg_denoiser_forward.1} parent=0 // pred_check_branch
    %28 = sbr.rel (0) target = $region29
  $region28: #{cfg_denoiser_forward.1} parent=0 // pred_region
    _
  $region29: #{cfg_denoiser_forward.1} parent=0 // pred_fallthru
    _
  // Predicated region
  $region30: #{cfg_denoiser_forward.1} parent=0 // pred_check
    _
  $region31: #{cfg_denoiser_forward.1} parent=0 // pred_check_branch
    %30 = sbr.rel (0) target = $region33
  $region32: #{cfg_denoiser_forward.1} parent=0 // pred_region
    _
  $region33: #{cfg_denoiser_forward.1} parent=0 // pred_fallthru
    _
  // Predicated region
  $region34: #{cfg_denoiser_forward.1} parent=0 // pred_check
    _
  $region35: #{cfg_denoiser_forward.1} parent=0 // pred_check_branch
    %32 = sbr.rel (0) target = $region37
  $region36: #{cfg_denoiser_forward.1} parent=0 // pred_region
    _
  $region37: #{cfg_denoiser_forward.1} parent=0 // pred_fallthru
    _
  %s33 = sld [smem:[#allocation2]]
  %s34 = smul.f32 %s33, %s33
  %s35 = sadd.f32 %s34, 1.0
  %v36 = vstv %s35
  %v37 = vrsqrt.pop %v36
  %s38 = vtos %v37
  %v39 = vstv %s35
  %v40 = vrcp.pop %v39
  %s41 = vtos %v40
  %s42 = smul.f32 %s33, %s38
  %v43 = vld [vmem:[%s1] sm:$0xff]
  %v44 = vld [vmem:[%s6] sm:$0xf]
  %v46 = vcombine.high %v43, %v43
  %vm47 = vcmask 31744
  %v49 = vsel %vm47, %v44, 0
  %vm51 = vcmask 1043456
  %v52 = vsel %vm51, %v43, 0
  %v54 = vsel %vm51, %v46, 0
  %56 = vmatprep.subr.mxu0 %v54
  %57 = vmatpush1.msra.mxu0 %v52
  %58 = vmatprep.subr.mxu0 0.0
  %59 = vmatpush1.msra.mxu0 0.0
  %60 = vmatprep.subr.mxu0 0.0
  %61 = vmatpush1.msra.mxu0 0.0
  %62 = vmatprep.subr.mxu0 0.0
  %63 = vmatpush1.msra.mxu0 0.0
  %64 = vmatprep.subr.mxu0 0.0
  %65 = vmatpush1.msra.mxu0 0.0
  %66 = vmatprep.subr.mxu0 0.0
  %67 = vmatpush1.msra.mxu0 0.0
  %68 = vmatprep.subr.mxu0 0.0
  %69 = vmatpush1.msra.mxu0 0.0
  %70 = vmatprep.subr.mxu0 0.0
  %71 = vmatpush1.msra.mxu0 0.0
  %72 = vmatprep.subr.mxu0 0.0
  %73 = vmatpush1.msra.mxu0 0.0
  %74 = vmatprep.subr.mxu0 0.0
  %75 = vmatpush1.msra.mxu0 0.0
  %76 = vmatprep.subr.mxu0 0.0
  %77 = vmatpush1.msra.mxu0 0.0
  %78 = vmatprep.subr.mxu0 0.0
  %79 = vmatpush1.msra.mxu0 0.0
  %80 = vmatprep.subr.mxu0 0.0
  %81 = vmatpush1.msra.mxu0 0.0
  %82 = vmatprep.subr.mxu0 0.0
  %83 = vmatpush1.msra.mxu0 0.0
  %84 = vmatprep.subr.mxu0 0.0
  %85 = vmatpush1.msra.mxu0 0.0
  %86 = vmatprep.subr.mxu0 0.0
  %87 = vmatpush1.msra.mxu0 0.0
  %88 = vmatprep.subr.mxu0 0.0
  %89 = vmatpush1.msra.mxu0 0.0
  %90 = vmatprep.subr.mxu0 0.0
  %91 = vmatpush1.msra.mxu0 0.0
  %92 = vmatprep.subr.mxu0 0.0
  %93 = vmatpush1.msra.mxu0 0.0
  %94 = vmatprep.subr.mxu0 0.0
  %95 = vmatpush1.msra.mxu0 0.0
  %96 = vmatprep.subr.mxu0 0.0
  %97 = vmatpush1.msra.mxu0 0.0
  %98 = vmatprep.subr.mxu0 0.0
  %99 = vmatpush1.msra.mxu0 0.0
  %100 = vmatprep.subr.mxu0 0.0
  %101 = vmatpush1.msra.mxu0 0.0
  %102 = vmatprep.subr.mxu0 0.0
  %103 = vmatpush1.msra.mxu0 0.0
  %104 = vmatprep.subr.mxu0 0.0
  %105 = vmatpush1.msra.mxu0 0.0
  %106 = vmatprep.subr.mxu0 0.0
  %107 = vmatpush1.msra.mxu0 0.0
  %108 = vmatprep.subr.mxu0 0.0
  %109 = vmatpush1.msra.mxu0 0.0
  %110 = vmatprep.subr.mxu0 0.0
  %111 = vmatpush1.msra.mxu0 0.0
  %112 = vmatprep.subr.mxu0 0.0
  %113 = vmatpush1.msra.mxu0 0.0
  %114 = vmatprep.subr.mxu0 0.0
  %115 = vmatpush1.msra.mxu0 0.0
  %116 = vmatprep.subr.mxu0 0.0
  %117 = vmatpush1.msra.mxu0 0.0
  %118 = vmatprep.subr.mxu0 0.0
  %119 = vmatpush1.msra.mxu0 0.0
  %120 = vmatprep.mubr.f32.mxu0 0.0
  %121 = vmatmul.mubr.f32.gmra.mrb[0].mxu0 %v49
  %v122 = vpop.f32.mrb[0].mxu0
  %v123 = vadd.f32 0.0, %v122
  %v124 = vpop.f32.mrb[0].mxu0
  %v125 = vadd.f32 0.0, %v124
  %126 = vdwg.mxu0
  %v127 = vstv %s38
  %v128 = vmul.f32 %v123, %v127
  %v129 = vmul.f32 %v125, %v127
  %v130 = vld [vmem:[%s7] sm:$0xf]
  %v131 = vld [vmem:[%s2] sm:$0xff]
  %v133 = vcombine.high %v131, %v131
  %v135 = vsel %vm47, %v130, 0
  %v137 = vsel %vm51, %v131, 0
  %v139 = vsel %vm51, %v133, 0
  %141 = vmatprep.subr.mxu0 %v139
  %142 = vmatpush1.msra.mxu0 %v137
  %143 = vmatprep.subr.mxu0 0.0
  %144 = vmatpush1.msra.mxu0 0.0
  %145 = vmatprep.subr.mxu0 0.0
  %146 = vmatpush1.msra.mxu0 0.0
  %147 = vmatprep.subr.mxu0 0.0
  %148 = vmatpush1.msra.mxu0 0.0
  %149 = vmatprep.subr.mxu0 0.0
  %150 = vmatpush1.msra.mxu0 0.0
  %151 = vmatprep.subr.mxu0 0.0
  %152 = vmatpush1.msra.mxu0 0.0
  %153 = vmatprep.subr.mxu0 0.0
  %154 = vmatpush1.msra.mxu0 0.0
  %155 = vmatprep.subr.mxu0 0.0
  %156 = vmatpush1.msra.mxu0 0.0
  %157 = vmatprep.subr.mxu0 0.0
  %158 = vmatpush1.msra.mxu0 0.0
  %159 = vmatprep.subr.mxu0 0.0
  %160 = vmatpush1.msra.mxu0 0.0
  %161 = vmatprep.subr.mxu0 0.0
  %162 = vmatpush1.msra.mxu0 0.0
  %163 = vmatprep.subr.mxu0 0.0
  %164 = vmatpush1.msra.mxu0 0.0
  %165 = vmatprep.subr.mxu0 0.0
  %166 = vmatpush1.msra.mxu0 0.0
  %167 = vmatprep.subr.mxu0 0.0
  %168 = vmatpush1.msra.mxu0 0.0
  %169 = vmatprep.subr.mxu0 0.0
  %170 = vmatpush1.msra.mxu0 0.0
  %171 = vmatprep.subr.mxu0 0.0
  %172 = vmatpush1.msra.mxu0 0.0
  %173 = vmatprep.subr.mxu0 0.0
  %174 = vmatpush1.msra.mxu0 0.0
  %175 = vmatprep.subr.mxu0 0.0
  %176 = vmatpush1.msra.mxu0 0.0
  %177 = vmatprep.subr.mxu0 0.0
  %178 = vmatpush1.msra.mxu0 0.0
  %179 = vmatprep.subr.mxu0 0.0
  %180 = vmatpush1.msra.mxu0 0.0
  %181 = vmatprep.subr.mxu0 0.0
  %182 = vmatpush1.msra.mxu0 0.0
  %183 = vmatprep.subr.mxu0 0.0
  %184 = vmatpush1.msra.mxu0 0.0
  %185 = vmatprep.subr.mxu0 0.0
  %186 = vmatpush1.msra.mxu0 0.0
  %187 = vmatprep.subr.mxu0 0.0
  %188 = vmatpush1.msra.mxu0 0.0
  %189 = vmatprep.subr.mxu0 0.0
  %190 = vmatpush1.msra.mxu0 0.0
  %191 = vmatprep.subr.mxu0 0.0
  %192 = vmatpush1.msra.mxu0 0.0
  %193 = vmatprep.subr.mxu0 0.0
  %194 = vmatpush1.msra.mxu0 0.0
  %195 = vmatprep.subr.mxu0 0.0
  %196 = vmatpush1.msra.mxu0 0.0
  %197 = vmatprep.subr.mxu0 0.0
  %198 = vmatpush1.msra.mxu0 0.0
  %199 = vmatprep.subr.mxu0 0.0
  %200 = vmatpush1.msra.mxu0 0.0
  %201 = vmatprep.subr.mxu0 0.0
  %202 = vmatpush1.msra.mxu0 0.0
  %203 = vmatprep.subr.mxu0 0.0
  %204 = vmatpush1.msra.mxu0 0.0
  %205 = vmatprep.mubr.f32.mxu0 0.0
  %206 = vmatmul.mubr.f32.gmra.mrb[0].mxu0 %v135
  %v207 = vpop.f32.mrb[0].mxu0
  %v208 = vadd.f32 0.0, %v207
  %v209 = vpop.f32.mrb[0].mxu0
  %v210 = vadd.f32 0.0, %v209
  %211 = vdwg.mxu0
  %v212 = vld [vmem:[%s3] sm:$0xff]
  %v214 = vcombine.high %v212, %v212
  %v215 = vsel %vm51, %v212, 0
  %v217 = vsel %vm51, %v214, 0
  %219 = vmatprep.subr.mxu0 %v217
  %220 = vmatpush1.msra.mxu0 %v215
  %221 = vmatprep.subr.mxu0 0.0
  %222 = vmatpush1.msra.mxu0 0.0
  %223 = vmatprep.subr.mxu0 0.0
  %224 = vmatpush1.msra.mxu0 0.0
  %225 = vmatprep.subr.mxu0 0.0
  %226 = vmatpush1.msra.mxu0 0.0
  %227 = vmatprep.subr.mxu0 0.0
  %228 = vmatpush1.msra.mxu0 0.0
  %229 = vmatprep.subr.mxu0 0.0
  %230 = vmatpush1.msra.mxu0 0.0
  %231 = vmatprep.subr.mxu0 0.0
  %232 = vmatpush1.msra.mxu0 0.0
  %233 = vmatprep.subr.mxu0 0.0
  %234 = vmatpush1.msra.mxu0 0.0
  %235 = vmatprep.subr.mxu0 0.0
  %236 = vmatpush1.msra.mxu0 0.0
  %237 = vmatprep.subr.mxu0 0.0
  %238 = vmatpush1.msra.mxu0 0.0
  %239 = vmatprep.subr.mxu0 0.0
  %240 = vmatpush1.msra.mxu0 0.0
  %241 = vmatprep.subr.mxu0 0.0
  %242 = vmatpush1.msra.mxu0 0.0
  %243 = vmatprep.subr.mxu0 0.0
  %244 = vmatpush1.msra.mxu0 0.0
  %245 = vmatprep.subr.mxu0 0.0
  %246 = vmatpush1.msra.mxu0 0.0
  %247 = vmatprep.subr.mxu0 0.0
  %248 = vmatpush1.msra.mxu0 0.0
  %249 = vmatprep.subr.mxu0 0.0
  %250 = vmatpush1.msra.mxu0 0.0
  %251 = vmatprep.subr.mxu0 0.0
  %252 = vmatpush1.msra.mxu0 0.0
  %253 = vmatprep.subr.mxu0 0.0
  %254 = vmatpush1.msra.mxu0 0.0
  %255 = vmatprep.subr.mxu0 0.0
  %256 = vmatpush1.msra.mxu0 0.0
  %257 = vmatprep.subr.mxu0 0.0
  %258 = vmatpush1.msra.mxu0 0.0
  %259 = vmatprep.subr.mxu0 0.0
  %260 = vmatpush1.msra.mxu0 0.0
  %261 = vmatprep.subr.mxu0 0.0
  %262 = vmatpush1.msra.mxu0 0.0
  %263 = vmatprep.subr.mxu0 0.0
  %264 = vmatpush1.msra.mxu0 0.0
  %265 = vmatprep.subr.mxu0 0.0
  %266 = vmatpush1.msra.mxu0 0.0
  %267 = vmatprep.subr.mxu0 0.0
  %268 = vmatpush1.msra.mxu0 0.0
  %269 = vmatprep.subr.mxu0 0.0
  %270 = vmatpush1.msra.mxu0 0.0
  %271 = vmatprep.subr.mxu0 0.0
  %272 = vmatpush1.msra.mxu0 0.0
  %273 = vmatprep.subr.mxu0 0.0
  %274 = vmatpush1.msra.mxu0 0.0
  %275 = vmatprep.subr.mxu0 0.0
  %276 = vmatpush1.msra.mxu0 0.0
  %277 = vmatprep.subr.mxu0 0.0
  %278 = vmatpush1.msra.mxu0 0.0
  %279 = vmatprep.subr.mxu0 0.0
  %280 = vmatpush1.msra.mxu0 0.0
  %281 = vmatprep.subr.mxu0 0.0
  %282 = vmatpush1.msra.mxu0 0.0
  %283 = vmatprep.mubr.f32.mxu0 0.0
  %284 = vmatmul.mubr.f32.gmra.mrb[0].mxu0 %v135
  %v285 = vpop.f32.mrb[0].mxu0
  %v286 = vadd.f32 0.0, %v285
  %v287 = vpop.f32.mrb[0].mxu0
  %v288 = vadd.f32 0.0, %v287
  %289 = vdwg.mxu0
  %v290 = vadd.f32 %v128, %v208
  %v291 = vadd.f32 %v129, %v210
  %v292 = vadd.f32 %v128, %v286
  %v293 = vadd.f32 %v129, %v288
  %v294 = vld [vmem:[%s4] sm:$0xff]
  %vm295 = vcmask 261120
  %v296 = vsel %vm295, %v294, 0.0
  %v297 = vrot.slane %v296, 4
  %v298 = vadd.f32 %v296, %v297
  %v299 = vrot.slane %v298, 2
  %v300 = vadd.f32 %v298, %v299
  %v301 = vrot.slane %v300, 1
  %v302 = vadd.f32 %v300, %v301
  %v303 = vrcp.pop 8.0
  %v304 = vmul.f32 %v302, %v303
  %v305 = vld [vmem:[%s5] sm:$0xff]
  %v306 = vsel %vm295, %v305, 0.0
  %v307 = vrot.slane %v306, 4
  %v308 = vadd.f32 %v306, %v307
  %v309 = vrot.slane %v308, 2
  %v310 = vadd.f32 %v308, %v309
  %v311 = vrot.slane %v310, 1
  %v312 = vadd.f32 %v310, %v311
  %v313 = vmul.f32 %v312, %v303
  %v314 = vld [vmem:[%s8] sm:$0xf]
  %v315 = vmul.f32 %v314, %v304
  %vm316 = vcmask 257024
  %v317 = vsel %vm316, %v315, 0.0
  %318 = vadd.xlane.f32.xlu0 %v317
  %v319 = vpop.xlane.xlu0 %318
  %v320 = vmul.f32 %v314, %v313
  %v321 = vsel %vm316, %v320, 0.0
  %322 = vadd.xlane.f32.xlu0 %v321
  %v323 = vpop.xlane.xlu0 %322
  %v324 = vadd.f32 %v290, %v319
  %v325 = vadd.f32 %v291, %v319
  %v326 = vtanh.pop %v324
  %v327 = vtanh.pop %v325
  %v328 = vadd.f32 %v290, %v323
  %v329 = vadd.f32 %v291, %v323
  %v330 = vtanh.pop %v328
  %v331 = vtanh.pop %v329
  %v332 = vadd.f32 %v292, %v323
  %v333 = vadd.f32 %v293, %v323
  %v334 = vtanh.pop %v332
  %v335 = vtanh.pop %v333
  %v336 = vsub.f32 %v326, %v330
  %v337 = vsub.f32 %v327, %v331
  %v338 = vmul.f32 %v336, 7.5
  %v339 = vmul.f32 %v337, 7.5
  %v340 = vadd.f32 %v334, %v338
  %v341 = vadd.f32 %v335, %v339
  %v342 = vsub.f32 %v330, %v334
  %v343 = vsub.f32 %v331, %v335
  %v344 = vmul.f32 %v342, 1.5
  %v345 = vmul.f32 %v343, 1.5
  %v346 = vadd.f32 %v340, %v344
  %v347 = vadd.f32 %v341, %v345
  %v348 = vstv %s41
  %v349 = vmul.f32 %v348, %v43
  %v350 = vstv %s42
  %v351 = vmul.f32 %v350, %v346
  %v352 = vmul.f32 %v350, %v347
  %v355 = vcombine.low %v351, %v352
  %v357 = vadd.f32 %v349, %v355
  %358 = vst [vmem:[%s9] sm:$0xff] %v357
  // Predicated region
  $region38: #{cfg_denoiser_forward.1} parent=0 // pred_check
    _
  $region39: #{cfg_denoiser_forward.1} parent=0 // pred_check_branch
    %360 = sbr.rel (0) target = $region41
  $region40: #{cfg_denoiser_forward.1} parent=0 // pred_region
    _
  $region41: #{cfg_denoiser_forward.1} parent=0 // pred_fallthru
    _
  // Predicated region
  $region42: #{cfg_denoiser_forward.1} parent=0 // pred_check
    _
  $region43: #{cfg_denoiser_forward.1} parent=0 // pred_check_branch
    %362 = sbr.rel (0) target = $region45
  $region44: #{cfg_denoiser_forward.1} parent=0 // pred_region
    _
  $region45: #{cfg_denoiser_forward.1} parent=0 // pred_fallthru
    _

</llo_original>
